<compile_context>
chip_gen: v7x
topology: tpu7x:2x2x1
jax: 0.10.0
libtpu: 0.0.40
codegen_flags: <defaults>
</compile_context>

<pallas_src>
import functools

import jax
import jax.numpy as jnp
from jax import lax
from jax.experimental import pallas as pl
from jax.experimental.pallas import tpu as pltpu


def _vq_kernel(flat_ref, emb_ref, embT_ref, emb_sq_ref, quant_ref, sse_ref):
    """One (batch b, tile i) step of the vector-quantizer hot path.

    flat_ref  : (C, TN)   channels-first input tile
    emb_ref   : (K, C)    codebook
    embT_ref  : (C, K)    codebook transpose (precomputed in the wrapper)
    emb_sq_ref: (K, 1)    per-code squared norms (precomputed in the wrapper)
    quant_ref : (C, TN)   quantized output tile
    sse_ref   : (1, 1)    per-tile sum of squared error (partial; summed outside)
    """
    flat = flat_ref[...].astype(jnp.float32)      # (C, TN)
    emb = emb_ref[...].astype(jnp.float32)        # (K, C)
    embT = embT_ref[...].astype(jnp.float32)      # (C, K)
    emb_sq = emb_sq_ref[...]                      # (K, 1) f32

    num_k = emb.shape[0]
    tn = flat.shape[1]

    # cross[k, n] = sum_c emb[k, c] * flat[c, n]                      (MXU)
    cross = lax.dot_general(emb, flat, (((1,), (0,)), ((), ())),
                            preferred_element_type=jnp.float32)       # (K, TN)

    # Distance surrogate ||e||^2 - 2 e.f ; the row-constant ||f||^2 term cannot
    # change the per-position argmin, so it is dropped.
    dist = emb_sq - 2.0 * cross                                       # (K, TN)

    # First-occurrence argmin over K (matches torch.argmin tie-breaking).
    row = lax.broadcasted_iota(jnp.int32, (num_k, tn), 0)
    min_d = jnp.min(dist, axis=0, keepdims=True)                      # (1, TN)
    idx = jnp.min(jnp.where(dist <= min_d, row, num_k),
                  axis=0, keepdims=True)                              # (1, TN)

    # One-hot encoding and quantization matmul: quant = emb.T @ onehot  (MXU)
    onehot = (row == idx).astype(jnp.float32)                         # (K, TN)
    quant = lax.dot_general(embT, onehot, (((1,), (0,)), ((), ())),
                            preferred_element_type=jnp.float32)       # (C, TN)
    quant_ref[...] = quant.astype(quant_ref.dtype)

    # Per-tile squared-error partial (used for the VQ losses).
    diff = quant - flat
    sse_ref[...] = jnp.sum(diff * diff, keepdims=True)                # (1, 1)


def _choose_tile_n(s, target):
    """Largest lane-friendly tile along the flattened-spatial axis."""
    if s <= target:
        return s                      # single full-row tile (block == array dim)
    t = target - (target % 128)
    while t >= 128:
        if s % t == 0:
            return t                  # lane-dense divisor of S
        t -= 128
    return s                          # fallback: one full-row tile


def _default_tile_n(c):
    """Keep each (C, tn) f32 tile around <= 1 MiB; lane dim multiple of 128."""
    budget_elems = (1 << 20) // 4                 # 256K f32 elements per tile
    t = (budget_elems // max(c, 1)) // 128 * 128
    return max(128, min(2048, t))


@functools.partial(jax.jit, static_argnames=("commitment_cost", "tile_n"))
def vector_quantizer(x, embedding, commitment_cost=0.25, tile_n=None):
    """Forward pass of VectorQuantizer.

    x         : (B, C, H, W, D) float32
    embedding : (K, C) codebook (nn.Embedding weight)
    returns   : (quant (B, C, H, W, D), loss scalar)
    """
    B, C, H, W, D = x.shape
    K, Ce = embedding.shape
    assert Ce == C
    S = H * W * D
    target = _default_tile_n(C) if tile_n is None else tile_n
    tn = _choose_tile_n(S, target)
    n_tiles = S // tn

    # Channels-first view -- no HBM transpose (x is already (B, C, spatial...)).
    x3 = x.reshape(B, C, S)
    # Hoisted codebook work (computed once, outside the grid loop).
    emb_sq = jnp.sum(embedding.astype(jnp.float32) ** 2, axis=1,
                     keepdims=True)                                   # (K, 1)
    embT = jnp.transpose(embedding)                                   # (C, K)

    quant3, sse = pl.pallas_call(
        _vq_kernel,
        out_shape=(
            jax.ShapeDtypeStruct((B, C, S), x.dtype),
            jax.ShapeDtypeStruct((B, n_tiles, 1, 1), jnp.float32),
        ),
        grid_spec=pltpu.PrefetchScalarGridSpec(
            num_scalar_prefetch=0,
            grid=(B, n_tiles),
            in_specs=[
                pl.BlockSpec((None, C, tn), lambda b, i: (b, 0, i)),
                pl.BlockSpec((K, C), lambda b, i: (0, 0)),
                pl.BlockSpec((C, K), lambda b, i: (0, 0)),
                pl.BlockSpec((K, 1), lambda b, i: (0, 0)),
            ],
            out_specs=[
                pl.BlockSpec((None, C, tn), lambda b, i: (b, 0, i)),
                pl.BlockSpec((None, None, 1, 1), lambda b, i: (b, i, 0, 0)),
            ],
        ),
        compiler_params=pltpu.CompilerParams(
            dimension_semantics=("parallel", "parallel")),  # independent tiles
    )(x3, embedding, embT, emb_sq)

    quant = quant3.reshape(B, C, H, W, D)

    # e_loss = mse(quant.detach(), x), q_loss = mse(quant, x.detach()); these are
    # numerically identical in the forward pass, so loss = (1 + commitment_cost)*mse.
    # TODO(synk): detach()/straight-through-estimator gradient routing has no
    # forward-only Pallas equivalent; forward values reproduced exactly.
    mse = jnp.sum(sse) / (B * C * S)
    loss = (1.0 + commitment_cost) * mse

    # quant = x + (quant - x).detach()  ==  quant (numerically) in the forward pass.
    return quant, loss


def _reference(x, embedding, commitment_cost=0.25):
    """Pure-JAX reference mirroring the PyTorch forward."""
    B, C, H, W, D = x.shape
    flat = jnp.transpose(x, (0, 2, 3, 4, 1)).reshape(-1, C)
    dist = (jnp.sum(flat ** 2, axis=1, keepdims=True)
            - 2.0 * flat @ embedding.T
            + jnp.sum(embedding ** 2, axis=1))
    idx = jnp.argmin(dist, axis=1)
    enc = jax.nn.one_hot(idx, embedding.shape[0], dtype=flat.dtype)
    quant_flat = enc @ embedding
    quant = jnp.transpose(quant_flat.reshape(B, H, W, D, C), (0, 4, 1, 2, 3))
    mse = jnp.mean((quant - x) ** 2)
    return quant, (1.0 + commitment_cost) * mse


if __name__ == "__main__":
    key = jax.random.PRNGKey(0)
    k_x, k_emb = jax.random.split(key)

    B, C, H, W, D = 2, 4, 8, 8, 8           # small 5-D input (B, C, H, W, D)
    num_embeddings, embedding_dim = 16, C   # codebook: nn.Embedding(16, 4)

    x = jax.random.normal(k_x, (B, C, H, W, D), dtype=jnp.float32)
    # nn.Embedding weight init: uniform(-1/K, 1/K)
    embedding = jax.random.uniform(
        k_emb, (num_embeddings, embedding_dim), dtype=jnp.float32,
        minval=-1.0 / num_embeddings, maxval=1.0 / num_embeddings)

    quant, loss = vector_quantizer(x, embedding, commitment_cost=0.25)
    quant, loss = jax.block_until_ready((quant, loss))

    q_ref, l_ref = _reference(x, embedding, 0.25)
    assert quant.shape == x.shape and quant.dtype == x.dtype

    close = jnp.isclose(quant, q_ref, atol=1e-5, rtol=1e-5)
    if not bool(jnp.all(close)):
        # An FP-level near-tie in the codebook argmin can legitimately pick a
        # different (equally-near) code than the reference; tolerate mismatches
        # only at positions whose best-vs-second-best distance gap is degenerate.
        flat = jnp.transpose(x, (0, 2, 3, 4, 1)).reshape(-1, C)
        dist = (jnp.sum(flat ** 2, axis=1, keepdims=True)
                - 2.0 * flat @ embedding.T
                + jnp.sum(embedding ** 2, axis=1))
        top2 = jnp.sort(dist, axis=1)[:, :2]
        gap = top2[:, 1] - top2[:, 0]
        pos_mismatch = jnp.any(
            ~jnp.transpose(close, (0, 2, 3, 4, 1)).reshape(-1, C), axis=1)
        assert bool(jnp.all(jnp.where(pos_mismatch, gap < 1e-4, True))), \
            "quant mismatch not explained by an argmin near-tie"
    assert jnp.allclose(loss, l_ref, atol=1e-5, rtol=1e-5)

    print("KERNEL_OK")
</pallas_src>

<mosaic_0001>
module attributes {stable_mosaic.version = 11 : i64} {
  func.func @_vq_kernel(%arg0: i32, %arg1: i32, %arg2: memref<1x4x512xf32, #tpu.memory_space<vmem>>, %arg3: memref<16x4xf32, #tpu.memory_space<vmem>>, %arg4: memref<4x16xf32, #tpu.memory_space<vmem>>, %arg5: memref<16x1xf32, #tpu.memory_space<vmem>>, %arg6: memref<1x4x512xf32, #tpu.memory_space<vmem>>, %arg7: memref<1x1x1x1xf32, #tpu.memory_space<vmem>>) attributes {dimension_semantics = [#tpu.dimension_semantics<parallel>, #tpu.dimension_semantics<parallel>], iteration_bounds = array<i64: 2, 1>, scalar_prefetch = 0 : i64, scratch_operands = 0 : i64, tpu.core_type = #tpu.core_type<tc>, window_params = [{transform_indices = @transform_0, window_bounds = array<i64: 1, 4, 512>}, {pipeline_mode = #tpu.pipeline_mode<synchronous>, transform_indices = @transform_1, window_bounds = array<i64: 16, 4>}, {pipeline_mode = #tpu.pipeline_mode<synchronous>, transform_indices = @transform_2, window_bounds = array<i64: 4, 16>}, {pipeline_mode = #tpu.pipeline_mode<synchronous>, transform_indices = @transform_3, window_bounds = array<i64: 16, 1>}, {transform_indices = @transform_4, window_bounds = array<i64: 1, 4, 512>}, {transform_indices = @transform_5, window_bounds = array<i64: 1, 1, 1, 1>}]} {
    %c0 = arith.constant 0 : index
    %c0_0 = arith.constant 0 : index
    %c0_1 = arith.constant 0 : index
    %0 = vector.load %arg2[%c0, %c0_0, %c0_1] : memref<1x4x512xf32, #tpu.memory_space<vmem>>, vector<1x4x512xf32>
    %1 = vector.shape_cast %0 : vector<1x4x512xf32> to vector<4x512xf32>
    %c0_2 = arith.constant 0 : index
    %c0_3 = arith.constant 0 : index
    %2 = vector.load %arg3[%c0_2, %c0_3] : memref<16x4xf32, #tpu.memory_space<vmem>>, vector<16x4xf32>
    %c0_4 = arith.constant 0 : index
    %c0_5 = arith.constant 0 : index
    %3 = vector.load %arg4[%c0_4, %c0_5] : memref<4x16xf32, #tpu.memory_space<vmem>>, vector<4x16xf32>
    %c0_6 = arith.constant 0 : index
    %c0_7 = arith.constant 0 : index
    %4 = vector.load %arg5[%c0_6, %c0_7] : memref<16x1xf32, #tpu.memory_space<vmem>>, vector<16x1xf32>
    %cst = arith.constant dense<0.000000e+00> : vector<16x512xf32>
    %5 = tpu.matmul %2, %1, %cst {dimension_numbers = #tpu.dot_dimension_numbers<[1], [0], [0], [1], [0, 0, 1, 1], [], []>} : vector<16x4xf32>, vector<4x512xf32>, vector<16x512xf32> -> vector<16x512xf32>
    %cst_8 = arith.constant 2.000000e+00 : f32
    %6 = vector.broadcast %cst_8 : f32 to vector<16x512xf32>
    %7 = arith.mulf %6, %5 : vector<16x512xf32>
    %8 = vector.broadcast %4 : vector<16x1xf32> to vector<16x512xf32>
    %9 = arith.subf %8, %7 : vector<16x512xf32>
    %10 = tpu.iota {dimensions = array<i32: 0>} : vector<16x512xi32>
    %cst_9 = arith.constant dense<0x7F800000> : vector<512xf32>
    %11 = vector.multi_reduction <minimumf>, %9, %cst_9 [0] : vector<16x512xf32> to vector<512xf32>
    %12 = vector.shape_cast %11 : vector<512xf32> to vector<1x512xf32>
    %13 = vector.broadcast %12 : vector<1x512xf32> to vector<16x512xf32>
    %14 = arith.cmpf ole, %9, %13 : vector<16x512xf32>
    %c16_i32 = arith.constant 16 : i32
    %15 = vector.broadcast %c16_i32 : i32 to vector<16x512xi32>
    %16 = arith.select %14, %10, %15 : vector<16x512xi1>, vector<16x512xi32>
    %cst_10 = arith.constant dense<2147483647> : vector<512xi32>
    %17 = vector.multi_reduction <minsi>, %16, %cst_10 [0] : vector<16x512xi32> to vector<512xi32>
    %18 = vector.shape_cast %17 : vector<512xi32> to vector<1x512xi32>
    %19 = vector.broadcast %18 : vector<1x512xi32> to vector<16x512xi32>
    %20 = arith.cmpi eq, %10, %19 : vector<16x512xi32>
    %21 = arith.extui %20 : vector<16x512xi1> to vector<16x512xi32>
    %22 = arith.sitofp %21 : vector<16x512xi32> to vector<16x512xf32>
    %cst_11 = arith.constant dense<0.000000e+00> : vector<4x512xf32>
    %23 = tpu.matmul %3, %22, %cst_11 {dimension_numbers = #tpu.dot_dimension_numbers<[1], [0], [0], [1], [0, 0, 1, 1], [], []>} : vector<4x16xf32>, vector<16x512xf32>, vector<4x512xf32> -> vector<4x512xf32>
    %c0_12 = arith.constant 0 : index
    %c0_13 = arith.constant 0 : index
    %c0_14 = arith.constant 0 : index
    %24 = vector.load %arg6[%c0_12, %c0_13, %c0_14] : memref<1x4x512xf32, #tpu.memory_space<vmem>>, vector<1x4x512xf32>
    %25 = vector.shape_cast %24 : vector<1x4x512xf32> to vector<4x512xf32>
    %26 = vector.shape_cast %23 : vector<4x512xf32> to vector<1x4x512xf32>
    tpu.vector_store %arg6[%c0_12, %c0_13, %c0_14], %26 {strides = array<i32>} : memref<1x4x512xf32, #tpu.memory_space<vmem>>, vector<1x4x512xf32>,
    %27 = arith.subf %23, %1 : vector<4x512xf32>
    %28 = arith.mulf %27, %27 : vector<4x512xf32>
    %29 = vector.shape_cast %28 : vector<4x512xf32> to vector<1x4x512xf32>
    %cst_15 = arith.constant dense<0.000000e+00> : vector<1xf32>
    %30 = vector.multi_reduction <add>, %29, %cst_15 [1, 2] : vector<1x4x512xf32> to vector<1xf32>
    %31 = vector.shape_cast %30 : vector<1xf32> to vector<1x1x1xf32>
    %32 = vector.extract %31[0, 0, 0] : f32 from vector<1x1x1xf32>
    %33 = vector.broadcast %32 : f32 to vector<1x1xf32>
    %c0_16 = arith.constant 0 : index
    %c0_17 = arith.constant 0 : index
    %c0_18 = arith.constant 0 : index
    %c0_19 = arith.constant 0 : index
    %34 = vector.load %arg7[%c0_16, %c0_17, %c0_18, %c0_19] : memref<1x1x1x1xf32, #tpu.memory_space<vmem>>, vector<1x1x1x1xf32>
    %35 = vector.shape_cast %34 : vector<1x1x1x1xf32> to vector<1x1xf32>
    %36 = vector.shape_cast %33 : vector<1x1xf32> to vector<1x1x1x1xf32>
    tpu.vector_store %arg7[%c0_16, %c0_17, %c0_18, %c0_19], %36 {strides = array<i32>} : memref<1x1x1x1xf32, #tpu.memory_space<vmem>>, vector<1x1x1x1xf32>,
    return
  }
  func.func @transform_0(%arg0: i32, %arg1: i32) -> (i32, i32, i32) {
    %c0_i32 = arith.constant 0 : i32
    %c0_i32_0 = arith.constant 0 : i32
    return %arg0, %c0_i32, %arg1 : i32, i32, i32
  }
  func.func @transform_1(%arg0: i32, %arg1: i32) -> (i32, i32) {
    %c0_i32 = arith.constant 0 : i32
    %c0_i32_0 = arith.constant 0 : i32
    %c0_i32_1 = arith.constant 0 : i32
    return %c0_i32, %c0_i32_0 : i32, i32
  }
  func.func @transform_2(%arg0: i32, %arg1: i32) -> (i32, i32) {
    %c0_i32 = arith.constant 0 : i32
    %c0_i32_0 = arith.constant 0 : i32
    %c0_i32_1 = arith.constant 0 : i32
    return %c0_i32, %c0_i32_0 : i32, i32
  }
  func.func @transform_3(%arg0: i32, %arg1: i32) -> (i32, i32) {
    %c0_i32 = arith.constant 0 : i32
    %c0_i32_0 = arith.constant 0 : i32
    %c0_i32_1 = arith.constant 0 : i32
    return %c0_i32, %c0_i32_0 : i32, i32
  }
  func.func @transform_4(%arg0: i32, %arg1: i32) -> (i32, i32, i32) {
    %c0_i32 = arith.constant 0 : i32
    %c0_i32_0 = arith.constant 0 : i32
    return %arg0, %c0_i32, %arg1 : i32, i32, i32
  }
  func.func @transform_5(%arg0: i32, %arg1: i32) -> (i32, i32, i32, i32) {
    %c0_i32 = arith.constant 0 : i32
    %c0_i32_0 = arith.constant 0 : i32
    %c0_i32_1 = arith.constant 0 : i32
    return %arg0, %arg1, %c0_i32, %c0_i32_0 : i32, i32, i32, i32
  }
}

</mosaic_0001>

<llo_original>
// kernel: vector_quantizer.1
$region0: #{vector_quantizer.1}
  #allocation0 [shape = 'u32[]', space=smem, size = 0x4, offset = 0x4, fixed_abs, tag = 'smem constant byte address 0x4 - core index']
  #allocation1 [shape = 'u32[144,128]{1,0:T(1,128)}', space=vmem, size = 0x12000, scoped, tag = 'internal scratch']
  %s0 = inlined_call_operand.vmem [shape: f32[2,4,512], index: 0, kind: input, shape index: {}]
  %s1 = inlined_call_operand.vmem [shape: f32[16,4], index: 1, kind: input, shape index: {}]
  %s2 = inlined_call_operand.vmem [shape: f32[4,16], index: 2, kind: input, shape index: {}]
  %s3 = inlined_call_operand.vmem [shape: f32[16,1], index: 3, kind: input, shape index: {}]
  %s4 = inlined_call_operand.vmem [shape: f32[2,4,512], index: 4, kind: output, shape index: {0}]
  %s5 = inlined_call_operand.vmem [shape: f32[2,1,1,1], index: 5, kind: output, shape index: {1}]
  %6 = xla_tuple %s4, %s5
  %s7 = sld [smem:[#allocation0]]
  $region57: #{vector_quantizer.1} parent=0
    _
  %s9 = ssub.s32 1, %s7
  %s10 = scalar_select 0, %s9, %s7
  loop: start=0, step=1, limit=4
  $region2: #{vector_quantizer.1} parent=0 // loop_pre_header
    _
  $region3: #{vector_quantizer.1} parent=0 // loop_header
    %s12 = sphi 0, %s16
    %p13 = scmp.ge.s32.totalorder %s12, 4
    %s19 = sphi 0, %s31
    %s20 = sphi 0, %s27
    %s21 = sphi 0, %s19
    %s22 = sphi 0, %s20
    %s23 = sphi 0, %s21
    %s24 = sphi 0, %s22
    %s36 = sphi 0, %s38
    %s39 = sphi 0, %s36
    %s40 = sphi 0, %s39
    %s56 = sphi 0, %s40
    %s60 = sphi 0, %s60
    %s62 = sphi 0, %s60
    %s63 = sphi 0, %s62
    %s77 = sphi 0, %s63
    %s81 = sphi 0, %s81
    %s83 = sphi 0, %s81
    %s84 = sphi 0, %s83
    %s98 = sphi 0, %s84
    %s102 = sphi 0, %s102
    %s104 = sphi 0, %s102
    %s105 = sphi 0, %s104
    %s119 = sphi 0, %s105
    %s127 = sphi 0, %s129
    %s130 = sphi 0, %s127
    %s131 = sphi 0, %s130
    %s147 = sphi 0, %s131
    %s155 = sphi 0, %s157
    %s158 = sphi 0, %s155
    %s159 = sphi 0, %s158
    %s175 = sphi 0, %s159
  $region4: #{vector_quantizer.1} parent=0 // loop_header_branch
    %15 = sbr.rel (%p13) target = $region8
  $region5: #{vector_quantizer.1} parent=0 // loop_body
    %s17 = ssub.s32 %s12, 1
    %s18 = ssub.s32 %s12, 2
    %s25 = sadd.s32 1, %s20
    %p26 = scmp.ge.s32.totalorder %s25, 1
    %s27 = scalar_select %p26, 0, %s25
    %s28 = sadd.s32 1, %s19
    %s29 = scalar_select %p26, %s28, %s19
    %p30 = scmp.ge.s32.totalorder %s29, 2
    %s31 = scalar_select %p30, 0, %s29
    %s32 = ssub.s32 %s19, %s31
    %s33 = ssub.s32 %s20, %s27
    %s34 = sor.u32 %s32, %s33
    %p35 = scmp.eq.s32.totalorder %s34, 0
    %s37 = sadd.s32 %s36, 1
    %s38 = scalar_select %p35, %s36, %s37
    %p41 = pneg %p35
    %p42 = scmp.eq.s32.totalorder %s12, 1
    %p43 = por %p41, %p42
    %p44 = scmp.ne.s32.totalorder %s36, %s39
    %p45 = scmp.eq.s32.totalorder %s12, 0
    %p46 = por %p44, %p45
    %p47 = scmp.ne.s32.totalorder %s36, %s39
    %p48 = scmp.eq.s32.totalorder %s17, 1
    %p49 = por %p47, %p48
    %p50 = scmp.ne.s32.totalorder %s39, %s40
    %p51 = scmp.eq.s32.totalorder %s17, 0
    %p52 = por %p50, %p51
    %p53 = scmp.ne.s32.totalorder %s39, %s40
    %p54 = scmp.eq.s32.totalorder %s18, 1
    %p55 = por %p53, %p54
    %p57 = scmp.ne.s32.totalorder %s40, %s56
    %p58 = scmp.eq.s32.totalorder %s18, 0
    %p59 = por %p57, %p58
    %s61 = sadd.s32 %s60, 1
    %p64 = scmp.eq.s32.totalorder %s12, 1
    %p65 = scmp.ne.s32.totalorder %s60, %s62
    %p66 = scmp.eq.s32.totalorder %s12, 0
    %p67 = por %p65, %p66
    %p68 = scmp.ne.s32.totalorder %s60, %s62
    %p69 = scmp.eq.s32.totalorder %s17, 1
    %p70 = por %p68, %p69
    %p71 = scmp.ne.s32.totalorder %s62, %s63
    %p72 = scmp.eq.s32.totalorder %s17, 0
    %p73 = por %p71, %p72
    %p74 = scmp.ne.s32.totalorder %s62, %s63
    %p75 = scmp.eq.s32.totalorder %s18, 1
    %p76 = por %p74, %p75
    %p78 = scmp.ne.s32.totalorder %s63, %s77
    %p79 = scmp.eq.s32.totalorder %s18, 0
    %p80 = por %p78, %p79
    %s82 = sadd.s32 %s81, 1
    %p85 = scmp.eq.s32.totalorder %s12, 1
    %p86 = scmp.ne.s32.totalorder %s81, %s83
    %p87 = scmp.eq.s32.totalorder %s12, 0
    %p88 = por %p86, %p87
    %p89 = scmp.ne.s32.totalorder %s81, %s83
    %p90 = scmp.eq.s32.totalorder %s17, 1
    %p91 = por %p89, %p90
    %p92 = scmp.ne.s32.totalorder %s83, %s84
    %p93 = scmp.eq.s32.totalorder %s17, 0
    %p94 = por %p92, %p93
    %p95 = scmp.ne.s32.totalorder %s83, %s84
    %p96 = scmp.eq.s32.totalorder %s18, 1
    %p97 = por %p95, %p96
    %p99 = scmp.ne.s32.totalorder %s84, %s98
    %p100 = scmp.eq.s32.totalorder %s18, 0
    %p101 = por %p99, %p100
    %s103 = sadd.s32 %s102, 1
    %p106 = scmp.eq.s32.totalorder %s12, 1
    %p107 = scmp.ne.s32.totalorder %s102, %s104
    %p108 = scmp.eq.s32.totalorder %s12, 0
    %p109 = por %p107, %p108
    %p110 = scmp.ne.s32.totalorder %s102, %s104
    %p111 = scmp.eq.s32.totalorder %s17, 1
    %p112 = por %p110, %p111
    %p113 = scmp.ne.s32.totalorder %s104, %s105
    %p114 = scmp.eq.s32.totalorder %s17, 0
    %p115 = por %p113, %p114
    %p116 = scmp.ne.s32.totalorder %s104, %s105
    %p117 = scmp.eq.s32.totalorder %s18, 1
    %p118 = por %p116, %p117
    %p120 = scmp.ne.s32.totalorder %s105, %s119
    %p121 = scmp.eq.s32.totalorder %s18, 0
    %p122 = por %p120, %p121
    %s123 = ssub.s32 %s19, %s31
    %s124 = ssub.s32 %s20, %s27
    %s125 = sor.u32 %s123, %s124
    %p126 = scmp.eq.s32.totalorder %s125, 0
    %s128 = sadd.s32 %s127, 1
    %s129 = scalar_select %p126, %s127, %s128
    %p132 = pneg %p126
    %p133 = scmp.eq.s32.totalorder %s12, 1
    %p134 = por %p132, %p133
    %p135 = scmp.ne.s32.totalorder %s127, %s130
    %p136 = scmp.eq.s32.totalorder %s12, 0
    %p137 = por %p135, %p136
    %p138 = scmp.ne.s32.totalorder %s127, %s130
    %p139 = scmp.eq.s32.totalorder %s17, 1
    %p140 = por %p138, %p139
    %p141 = scmp.ne.s32.totalorder %s130, %s131
    %p142 = scmp.eq.s32.totalorder %s17, 0
    %p143 = por %p141, %p142
    %p144 = scmp.ne.s32.totalorder %s130, %s131
    %p145 = scmp.eq.s32.totalorder %s18, 1
    %p146 = por %p144, %p145
    %p148 = scmp.ne.s32.totalorder %s131, %s147
    %p149 = scmp.eq.s32.totalorder %s18, 0
    %p150 = por %p148, %p149
    %s151 = ssub.s32 %s19, %s31
    %s152 = ssub.s32 %s20, %s27
    %s153 = sor.u32 %s151, %s152
    %p154 = scmp.eq.s32.totalorder %s153, 0
    %s156 = sadd.s32 %s155, 1
    %s157 = scalar_select %p154, %s155, %s156
    %p160 = pneg %p154
    %p161 = scmp.eq.s32.totalorder %s12, 1
    %p162 = por %p160, %p161
    %p163 = scmp.ne.s32.totalorder %s155, %s158
    %p164 = scmp.eq.s32.totalorder %s12, 0
    %p165 = por %p163, %p164
    %p166 = scmp.ne.s32.totalorder %s155, %s158
    %p167 = scmp.eq.s32.totalorder %s17, 1
    %p168 = por %p166, %p167
    %p169 = scmp.ne.s32.totalorder %s158, %s159
    %p170 = scmp.eq.s32.totalorder %s17, 0
    %p171 = por %p169, %p170
    %p172 = scmp.ne.s32.totalorder %s158, %s159
    %p173 = scmp.eq.s32.totalorder %s18, 1
    %p174 = por %p172, %p173
    %p176 = scmp.ne.s32.totalorder %s159, %s175
    %p177 = scmp.eq.s32.totalorder %s18, 0
    %p178 = por %p176, %p177
    %p179 = scmp.le.s32.totalorder 1, %s12
    %p180 = scmp.lt.s32.totalorder %s12, 3
    %p181 = pnand %p179, %p180
    %p182 = pneg %p181
    // Predicated region
    $region9: #{vector_quantizer.1} parent=5 // pred_check
      _
    $region10: #{vector_quantizer.1} parent=5 // pred_check_branch
      %184 = sbr.rel (%p181) target = $region12
    $region11: #{vector_quantizer.1} parent=5 // pred_region
      %s185 = ssub.s32 %s12, 1
      // Predicated region
      $region13: #{vector_quantizer.1} parent=11 // pred_check
        %p186 = pneg %p73
      $region14: #{vector_quantizer.1} parent=11 // pred_check_branch
        %188 = sbr.rel (%p186) target = $region16
      $region15: #{vector_quantizer.1} parent=11 // pred_region
        _
      $region16: #{vector_quantizer.1} parent=11 // pred_fallthru
        _
      // Predicated region
      $region17: #{vector_quantizer.1} parent=11 // pred_check
        %p189 = pneg %p94
      $region18: #{vector_quantizer.1} parent=11 // pred_check_branch
        %191 = sbr.rel (%p189) target = $region20
      $region19: #{vector_quantizer.1} parent=11 // pred_region
        _
      $region20: #{vector_quantizer.1} parent=11 // pred_fallthru
        _
      // Predicated region
      $region21: #{vector_quantizer.1} parent=11 // pred_check
        %p192 = pneg %p115
      $region22: #{vector_quantizer.1} parent=11 // pred_check_branch
        %194 = sbr.rel (%p192) target = $region24
      $region23: #{vector_quantizer.1} parent=11 // pred_region
        _
      $region24: #{vector_quantizer.1} parent=11 // pred_fallthru
        _
    $region12: #{vector_quantizer.1} parent=5 // pred_fallthru
      _
    %p195 = scmp.lt.s32.totalorder %s12, 2
    // Predicated region
    $region25: #{vector_quantizer.1} parent=5 // pred_check
      %p196 = pneg %p195
    $region26: #{vector_quantizer.1} parent=5 // pred_check_branch
      %198 = sbr.rel (%p196) target = $region28
    $region27: #{vector_quantizer.1} parent=5 // pred_region
      // Predicated region
      $region29: #{vector_quantizer.1} parent=27 // pred_check
        %p199 = pneg %p46
      $region30: #{vector_quantizer.1} parent=27 // pred_check_branch
        %201 = sbr.rel (%p199) target = $region32
      $region31: #{vector_quantizer.1} parent=27 // pred_region
        %s202 = smul.u32 4, %s20
        %p203 = scmp.lt.s32.totalorder %s19, 1
        %s204 = scalar_select %p203, %s19, 1
        %p205 = scmp.lt.s32.totalorder %s202, 3
        %s206 = scalar_select %p205, %s202, 3
        %s207 = smul.addr %s204, 4
        %s208 = sadd.s32 %s206, %s207
        %s209 = smul.addr %s208, 4
        %s210 = scalar_lea.vmem %s0, %s209
        %s211 = smul.u32 4, %s20
      $region32: #{vector_quantizer.1} parent=27 // pred_fallthru
        _
    $region28: #{vector_quantizer.1} parent=5 // pred_fallthru
      _
    %p212 = scmp.le.s32.totalorder 1, %s12
    %p213 = scmp.lt.s32.totalorder %s12, 3
    %p214 = pnand %p212, %p213
    %p215 = pneg %p214
    // Predicated region
    $region33: #{vector_quantizer.1} parent=5 // pred_check
      _
    $region34: #{vector_quantizer.1} parent=5 // pred_check_branch
      %217 = sbr.rel (%p214) target = $region36
    $region35: #{vector_quantizer.1} parent=5 // pred_region
      %s218 = ssub.s32 %s12, 1
      %s219 = smul.u32 4, %s22
      %p220 = scmp.lt.s32.totalorder %s21, 1
      %s221 = scalar_select %p220, %s21, 1
      %p222 = scmp.lt.s32.totalorder %s219, 3
      %s223 = scalar_select %p222, %s219, 3
      %s224 = smul.addr %s221, 4
      %s225 = sadd.s32 %s223, %s224
      %s226 = smul.addr %s225, 4
      %s227 = scalar_lea.vmem %s0, %s226
      %p228 = pneg %p52
      %p229 = pneg %p49
      %p230 = pneg %p73
      %p231 = pneg %p70
      %p232 = pneg %p94
      %p233 = pneg %p91
      %p234 = pneg %p115
      %p235 = pneg %p112
      %p236 = pneg %p143
      %p237 = pneg %p140
      %s238 = smul.u32 4, %s22
      %p239 = scmp.lt.s32.totalorder %s21, 1
      %s240 = scalar_select %p239, %s21, 1
      %p241 = scmp.lt.s32.totalorder %s238, 3
      %s242 = scalar_select %p241, %s238, 3
      %s243 = smul.addr %s240, 4
      %s244 = sadd.s32 %s242, %s243
      %s245 = smul.addr %s244, 4
      %s246 = scalar_lea.vmem %s4, %s245
      %p247 = pneg %p171
      %p248 = pneg %p168
      %p249 = scmp.lt.s32.totalorder %s21, 1
      %s250 = scalar_select %p249, %s21, 1
      %p251 = scmp.lt.s32.totalorder %s22, 0
      %s252 = scalar_select %p251, %s22, 0
      %s253 = sadd.s32 %s252, %s250
      %s254 = scalar_lea.vmem %s5, %s253
      %s255 = smul.u32 4, %s22
      %p256 = scmp.lt.s32.totalorder %s21, 1
      %s257 = scalar_select %p256, %s21, 1
      %p258 = scmp.lt.s32.totalorder %s255, 3
      %s259 = scalar_select %p258, %s255, 3
      %s260 = smul.addr %s257, 4
      %s261 = sadd.s32 %s259, %s260
      %s262 = smul.addr %s261, 4
      %s263 = scalar_lea.vmem %s0, %s262
      %s264 = smul.u32 4, %s22
      %s265 = smul.u32 4, %s22
      %p266 = scmp.lt.s32.totalorder %s21, 1
      %s267 = scalar_select %p266, %s21, 1
      %p268 = scmp.lt.s32.totalorder %s265, 3
      %s269 = scalar_select %p268, %s265, 3
      %s270 = smul.addr %s267, 4
      %s271 = sadd.s32 %s269, %s270
      %s272 = smul.addr %s271, 4
      %s273 = scalar_lea.vmem %s4, %s272
      %s274 = smul.u32 4, %s22
      %p275 = scmp.lt.s32.totalorder %s21, 1
      %s276 = scalar_select %p275, %s21, 1
      %p277 = scmp.lt.s32.totalorder %s22, 0
      %s278 = scalar_select %p277, %s22, 0
      %s279 = sadd.s32 %s278, %s276
      %s280 = scalar_lea.vmem %s5, %s279
      %v281 = vld [vmem:[%s263] sm:$0xff]
      %v282 = vld [vmem:[%s263 + $0x8] sm:$0xff]
      %v283 = vld [vmem:[%s1] sm:$0xff]
      %v284 = vld [vmem:[%s1 + $0x8] sm:$0xff]
      %v285 = vld [vmem:[%s2] sm:$0xf]
      %v286 = vld [vmem:[%s3] sm:$0xff]
      %v287 = vld [vmem:[%s3 + $0x8] sm:$0xff]
      %v290 = vcombine.high %v281, %v281
      %v291 = vcombine.high %v282, %v282
      %vm292 = vcmask 31744
      %v294 = vsel %vm292, %v283, 0
      %v297 = vsel %vm292, %v284, 0
      %vm299 = vcmask 1043456
      %v300 = vsel %vm299, %v281, 0
      %v302 = vsel %vm299, %v290, 0
      %v304 = vsel %vm299, %v282, 0
      %v306 = vsel %vm299, %v291, 0
      %308 = vmatprep.subr.mxu0 %v302
      %309 = vmatpush1.msra.mxu0 %v300
      %310 = vmatprep.subr.mxu0 0.0
      %311 = vmatpush1.msra.mxu0 0.0
      %312 = vmatprep.subr.mxu0 0.0
      %313 = vmatpush1.msra.mxu0 0.0
      %314 = vmatprep.subr.mxu0 0.0
      %315 = vmatpush1.msra.mxu0 0.0
      %316 = vmatprep.subr.mxu0 0.0
      %317 = vmatpush1.msra.mxu0 0.0
      %318 = vmatprep.subr.mxu0 0.0
      %319 = vmatpush1.msra.mxu0 0.0
      %320 = vmatprep.subr.mxu0 0.0
      %321 = vmatpush1.msra.mxu0 0.0
      %322 = vmatprep.subr.mxu0 0.0
      %323 = vmatpush1.msra.mxu0 0.0
      %324 = vmatprep.subr.mxu0 0.0
      %325 = vmatpush1.msra.mxu0 0.0
      %326 = vmatprep.subr.mxu0 0.0
      %327 = vmatpush1.msra.mxu0 0.0
      %328 = vmatprep.subr.mxu0 0.0
      %329 = vmatpush1.msra.mxu0 0.0
      %330 = vmatprep.subr.mxu0 0.0
      %331 = vmatpush1.msra.mxu0 0.0
      %332 = vmatprep.subr.mxu0 0.0
      %333 = vmatpush1.msra.mxu0 0.0
      %334 = vmatprep.subr.mxu0 0.0
      %335 = vmatpush1.msra.mxu0 0.0
      %336 = vmatprep.subr.mxu0 0.0
      %337 = vmatpush1.msra.mxu0 0.0
      %338 = vmatprep.subr.mxu0 0.0
      %339 = vmatpush1.msra.mxu0 0.0
      %340 = vmatprep.subr.mxu0 0.0
      %341 = vmatpush1.msra.mxu0 0.0
      %342 = vmatprep.subr.mxu0 0.0
      %343 = vmatpush1.msra.mxu0 0.0
      %344 = vmatprep.subr.mxu0 0.0
      %345 = vmatpush1.msra.mxu0 0.0
      %346 = vmatprep.subr.mxu0 0.0
      %347 = vmatpush1.msra.mxu0 0.0
      %348 = vmatprep.subr.mxu0 0.0
      %349 = vmatpush1.msra.mxu0 0.0
      %350 = vmatprep.subr.mxu0 0.0
      %351 = vmatpush1.msra.mxu0 0.0
      %352 = vmatprep.subr.mxu0 0.0
      %353 = vmatpush1.msra.mxu0 0.0
      %354 = vmatprep.subr.mxu0 0.0
      %355 = vmatpush1.msra.mxu0 0.0
      %356 = vmatprep.subr.mxu0 0.0
      %357 = vmatpush1.msra.mxu0 0.0
      %358 = vmatprep.subr.mxu0 0.0
      %359 = vmatpush1.msra.mxu0 0.0
      %360 = vmatprep.subr.mxu0 0.0
      %361 = vmatpush1.msra.mxu0 0.0
      %362 = vmatprep.subr.mxu0 0.0
      %363 = vmatpush1.msra.mxu0 0.0
      %364 = vmatprep.subr.mxu0 0.0
      %365 = vmatpush1.msra.mxu0 0.0
      %366 = vmatprep.subr.mxu0 0.0
      %367 = vmatpush1.msra.mxu0 0.0
      %368 = vmatprep.subr.mxu0 0.0
      %369 = vmatpush1.msra.mxu0 0.0
      %370 = vmatprep.subr.mxu0 0.0
      %371 = vmatpush1.msra.mxu0 0.0
      %372 = vmatprep.mubr.f32.mxu0 0.0
      %373 = vmatmul.mubr.f32.gmra.mrb[0].mxu0 %v294
      %v374 = vpop.f32.mrb[0].mxu0
      %v375 = vadd.f32 0.0, %v374
      %v376 = vpop.f32.mrb[0].mxu0
      %v377 = vadd.f32 0.0, %v376
      %378 = vmatprep.mubr.f32.mxu0 0.0
      %379 = vmatmul.mubr.f32.gmra.mrb[0].mxu0 %v297
      %v380 = vpop.f32.mrb[0].mxu0
      %v381 = vadd.f32 0.0, %v380
      %v382 = vpop.f32.mrb[0].mxu0
      %v383 = vadd.f32 0.0, %v382
      %384 = vdwg.mxu0
      %385 = vmatprep.subr.mxu0 %v306
      %386 = vmatpush1.msra.mxu0 %v304
      %387 = vmatprep.subr.mxu0 0.0
      %388 = vmatpush1.msra.mxu0 0.0
      %389 = vmatprep.subr.mxu0 0.0
      %390 = vmatpush1.msra.mxu0 0.0
      %391 = vmatprep.subr.mxu0 0.0
      %392 = vmatpush1.msra.mxu0 0.0
      %393 = vmatprep.subr.mxu0 0.0
      %394 = vmatpush1.msra.mxu0 0.0
      %395 = vmatprep.subr.mxu0 0.0
      %396 = vmatpush1.msra.mxu0 0.0
      %397 = vmatprep.subr.mxu0 0.0
      %398 = vmatpush1.msra.mxu0 0.0
      %399 = vmatprep.subr.mxu0 0.0
      %400 = vmatpush1.msra.mxu0 0.0
      %401 = vmatprep.subr.mxu0 0.0
      %402 = vmatpush1.msra.mxu0 0.0
      %403 = vmatprep.subr.mxu0 0.0
      %404 = vmatpush1.msra.mxu0 0.0
      %405 = vmatprep.subr.mxu0 0.0
      %406 = vmatpush1.msra.mxu0 0.0
      %407 = vmatprep.subr.mxu0 0.0
      %408 = vmatpush1.msra.mxu0 0.0
      %409 = vmatprep.subr.mxu0 0.0
      %410 = vmatpush1.msra.mxu0 0.0
      %411 = vmatprep.subr.mxu0 0.0
      %412 = vmatpush1.msra.mxu0 0.0
      %413 = vmatprep.subr.mxu0 0.0
      %414 = vmatpush1.msra.mxu0 0.0
      %415 = vmatprep.subr.mxu0 0.0
      %416 = vmatpush1.msra.mxu0 0.0
      %417 = vmatprep.subr.mxu0 0.0
      %418 = vmatpush1.msra.mxu0 0.0
      %419 = vmatprep.subr.mxu0 0.0
      %420 = vmatpush1.msra.mxu0 0.0
      %421 = vmatprep.subr.mxu0 0.0
      %422 = vmatpush1.msra.mxu0 0.0
      %423 = vmatprep.subr.mxu0 0.0
      %424 = vmatpush1.msra.mxu0 0.0
      %425 = vmatprep.subr.mxu0 0.0
      %426 = vmatpush1.msra.mxu0 0.0
      %427 = vmatprep.subr.mxu0 0.0
      %428 = vmatpush1.msra.mxu0 0.0
      %429 = vmatprep.subr.mxu0 0.0
      %430 = vmatpush1.msra.mxu0 0.0
      %431 = vmatprep.subr.mxu0 0.0
      %432 = vmatpush1.msra.mxu0 0.0
      %433 = vmatprep.subr.mxu0 0.0
      %434 = vmatpush1.msra.mxu0 0.0
      %435 = vmatprep.subr.mxu0 0.0
      %436 = vmatpush1.msra.mxu0 0.0
      %437 = vmatprep.subr.mxu0 0.0
      %438 = vmatpush1.msra.mxu0 0.0
      %439 = vmatprep.subr.mxu0 0.0
      %440 = vmatpush1.msra.mxu0 0.0
      %441 = vmatprep.subr.mxu0 0.0
      %442 = vmatpush1.msra.mxu0 0.0
      %443 = vmatprep.subr.mxu0 0.0
      %444 = vmatpush1.msra.mxu0 0.0
      %445 = vmatprep.subr.mxu0 0.0
      %446 = vmatpush1.msra.mxu0 0.0
      %447 = vmatprep.subr.mxu0 0.0
      %448 = vmatpush1.msra.mxu0 0.0
      %449 = vmatprep.mubr.f32.mxu0 0.0
      %450 = vmatmul.mubr.f32.gmra.mrb[0].mxu0 %v294
      %v451 = vpop.f32.mrb[0].mxu0
      %v452 = vadd.f32 0.0, %v451
      %v453 = vpop.f32.mrb[0].mxu0
      %v454 = vadd.f32 0.0, %v453
      %455 = vmatprep.mubr.f32.mxu0 0.0
      %456 = vmatmul.mubr.f32.gmra.mrb[0].mxu0 %v297
      %v457 = vpop.f32.mrb[0].mxu0
      %v458 = vadd.f32 0.0, %v457
      %v459 = vpop.f32.mrb[0].mxu0
      %v460 = vadd.f32 0.0, %v459
      %461 = vdwg.mxu0
      %v462 = vmul.f32 %v375, 2.0
      %v463 = vmul.f32 %v377, 2.0
      %v464 = vmul.f32 %v452, 2.0
      %v465 = vmul.f32 %v454, 2.0
      %v466 = vmul.f32 %v381, 2.0
      %v467 = vmul.f32 %v383, 2.0
      %v468 = vmul.f32 %v458, 2.0
      %v469 = vmul.f32 %v460, 2.0
      %471 = vset.pattern.permute.xlu0 0
      %472 = vperm.xlu0 %471, %v286
      %v473 = vpop.permute.xlu0 %472
      %476 = vset.pattern.permute.xlu0 0
      %477 = vperm.xlu0 %476, %v287
      %v478 = vpop.permute.xlu0 %477
      %v480 = vsub.f32 %v473, %v462
      %v481 = vsub.f32 %v473, %v463
      %v482 = vsub.f32 %v473, %v464
      %v483 = vsub.f32 %v473, %v465
      %v484 = vsub.f32 %v478, %v466
      %v485 = vsub.f32 %v478, %v467
      %v486 = vsub.f32 %v478, %v468
      %v487 = vsub.f32 %v478, %v469
      %v488 = vlaneseq
      %v489 = vshrl.u32 %v488, 7
      %v490 = vadd.s32 %v489, 8
      %v491 = vmin.f32 %v480, %v484
      %v492 = vrot.slane %v491, 4
      %v493 = vmin.f32 %v491, %v492
      %v494 = vrot.slane %v493, 2
      %v495 = vmin.f32 %v493, %v494
      %v496 = vrot.slane %v495, 1
      %v497 = vmin.f32 %v495, %v496
      %v498 = vmin.f32 %v481, %v485
      %v499 = vrot.slane %v498, 4
      %v500 = vmin.f32 %v498, %v499
      %v501 = vrot.slane %v500, 2
      %v502 = vmin.f32 %v500, %v501
      %v503 = vrot.slane %v502, 1
      %v504 = vmin.f32 %v502, %v503
      %v505 = vmin.f32 %v482, %v486
      %v506 = vrot.slane %v505, 4
      %v507 = vmin.f32 %v505, %v506
      %v508 = vrot.slane %v507, 2
      %v509 = vmin.f32 %v507, %v508
      %v510 = vrot.slane %v509, 1
      %v511 = vmin.f32 %v509, %v510
      %v512 = vmin.f32 %v483, %v487
      %v513 = vrot.slane %v512, 4
      %v514 = vmin.f32 %v512, %v513
      %v515 = vrot.slane %v514, 2
      %v516 = vmin.f32 %v514, %v515
      %v517 = vrot.slane %v516, 1
      %v518 = vmin.f32 %v516, %v517
      %vm519 = vcmp.le.f32.partialorder %v480, %v497
      %vm520 = vcmp.le.f32.partialorder %v481, %v504
      %vm521 = vcmp.le.f32.partialorder %v482, %v511
      %vm522 = vcmp.le.f32.partialorder %v483, %v518
      %vm523 = vcmp.le.f32.partialorder %v484, %v497
      %vm524 = vcmp.le.f32.partialorder %v485, %v504
      %vm525 = vcmp.le.f32.partialorder %v486, %v511
      %vm526 = vcmp.le.f32.partialorder %v487, %v518
      %v527 = vsel %vm519, %v489, 16
      %v528 = vsel %vm520, %v489, 16
      %v529 = vsel %vm521, %v489, 16
      %v530 = vsel %vm522, %v489, 16
      %v531 = vsel %vm523, %v490, 16
      %v532 = vsel %vm524, %v490, 16
      %v533 = vsel %vm525, %v490, 16
      %v534 = vsel %vm526, %v490, 16
      %vm535 = vcmp.lt.s32.totalorder %v527, %v531
      %v536 = vsel %vm535, %v527, %v531
      %v537 = vrot.slane %v536, 4
      %vm538 = vcmp.lt.s32.totalorder %v536, %v537
      %v539 = vsel %vm538, %v536, %v537
      %v540 = vrot.slane %v539, 2
      %vm541 = vcmp.lt.s32.totalorder %v539, %v540
      %v542 = vsel %vm541, %v539, %v540
      %v543 = vrot.slane %v542, 1
      %vm544 = vcmp.lt.s32.totalorder %v542, %v543
      %v545 = vsel %vm544, %v542, %v543
      %vm546 = vcmp.lt.s32.totalorder %v528, %v532
      %v547 = vsel %vm546, %v528, %v532
      %v548 = vrot.slane %v547, 4
      %vm549 = vcmp.lt.s32.totalorder %v547, %v548
      %v550 = vsel %vm549, %v547, %v548
      %v551 = vrot.slane %v550, 2
      %vm552 = vcmp.lt.s32.totalorder %v550, %v551
      %v553 = vsel %vm552, %v550, %v551
      %v554 = vrot.slane %v553, 1
      %vm555 = vcmp.lt.s32.totalorder %v553, %v554
      %v556 = vsel %vm555, %v553, %v554
      %vm557 = vcmp.lt.s32.totalorder %v529, %v533
      %v558 = vsel %vm557, %v529, %v533
      %v559 = vrot.slane %v558, 4
      %vm560 = vcmp.lt.s32.totalorder %v558, %v559
      %v561 = vsel %vm560, %v558, %v559
      %v562 = vrot.slane %v561, 2
      %vm563 = vcmp.lt.s32.totalorder %v561, %v562
      %v564 = vsel %vm563, %v561, %v562
      %v565 = vrot.slane %v564, 1
      %vm566 = vcmp.lt.s32.totalorder %v564, %v565
      %v567 = vsel %vm566, %v564, %v565
      %vm568 = vcmp.lt.s32.totalorder %v530, %v534
      %v569 = vsel %vm568, %v530, %v534
      %v570 = vrot.slane %v569, 4
      %vm571 = vcmp.lt.s32.totalorder %v569, %v570
      %v572 = vsel %vm571, %v569, %v570
      %v573 = vrot.slane %v572, 2
      %vm574 = vcmp.lt.s32.totalorder %v572, %v573
      %v575 = vsel %vm574, %v572, %v573
      %v576 = vrot.slane %v575, 1
      %vm577 = vcmp.lt.s32.totalorder %v575, %v576
      %v578 = vsel %vm577, %v575, %v576
      %vm579 = vcmp.eq.s32.totalorder %v489, %v545
      %vm580 = vcmp.eq.s32.totalorder %v489, %v556
      %vm581 = vcmp.eq.s32.totalorder %v489, %v567
      %vm582 = vcmp.eq.s32.totalorder %v489, %v578
      %vm583 = vcmp.eq.s32.totalorder %v490, %v545
      %vm584 = vcmp.eq.s32.totalorder %v490, %v556
      %vm585 = vcmp.eq.s32.totalorder %v490, %v567
      %vm586 = vcmp.eq.s32.totalorder %v490, %v578
      %v587 = vsel %vm579, 1, 0
      %v588 = vsel %vm580, 1, 0
      %v589 = vsel %vm581, 1, 0
      %v590 = vsel %vm582, 1, 0
      %v591 = vsel %vm583, 1, 0
      %v592 = vsel %vm584, 1, 0
      %v593 = vsel %vm585, 1, 0
      %v594 = vsel %vm586, 1, 0
      %v595 = vcvt.s32.f32 %v587
      %v596 = vcvt.s32.f32 %v588
      %v597 = vcvt.s32.f32 %v589
      %v598 = vcvt.s32.f32 %v590
      %v599 = vcvt.s32.f32 %v591
      %v600 = vcvt.s32.f32 %v592
      %v601 = vcvt.s32.f32 %v593
      %v602 = vcvt.s32.f32 %v594
      %vm603 = vcmask 130048
      %v605 = vsel %vm603, %v285, 0
      %607 = vmatprep.subr.mxu0 %v596
      %608 = vmatpush1.msra.mxu0 %v595
      %609 = vmatprep.subr.mxu0 %v600
      %610 = vmatpush1.msra.mxu0 %v599
      %611 = vmatprep.subr.mxu0 0.0
      %612 = vmatpush1.msra.mxu0 0.0
      %613 = vmatprep.subr.mxu0 0.0
      %614 = vmatpush1.msra.mxu0 0.0
      %615 = vmatprep.subr.mxu0 0.0
      %616 = vmatpush1.msra.mxu0 0.0
      %617 = vmatprep.subr.mxu0 0.0
      %618 = vmatpush1.msra.mxu0 0.0
      %619 = vmatprep.subr.mxu0 0.0
      %620 = vmatpush1.msra.mxu0 0.0
      %621 = vmatprep.subr.mxu0 0.0
      %622 = vmatpush1.msra.mxu0 0.0
      %623 = vmatprep.subr.mxu0 0.0
      %624 = vmatpush1.msra.mxu0 0.0
      %625 = vmatprep.subr.mxu0 0.0
      %626 = vmatpush1.msra.mxu0 0.0
      %627 = vmatprep.subr.mxu0 0.0
      %628 = vmatpush1.msra.mxu0 0.0
      %629 = vmatprep.subr.mxu0 0.0
      %630 = vmatpush1.msra.mxu0 0.0
      %631 = vmatprep.subr.mxu0 0.0
      %632 = vmatpush1.msra.mxu0 0.0
      %633 = vmatprep.subr.mxu0 0.0
      %634 = vmatpush1.msra.mxu0 0.0
      %635 = vmatprep.subr.mxu0 0.0
      %636 = vmatpush1.msra.mxu0 0.0
      %637 = vmatprep.subr.mxu0 0.0
      %638 = vmatpush1.msra.mxu0 0.0
      %639 = vmatprep.subr.mxu0 0.0
      %640 = vmatpush1.msra.mxu0 0.0
      %641 = vmatprep.subr.mxu0 0.0
      %642 = vmatpush1.msra.mxu0 0.0
      %643 = vmatprep.subr.mxu0 0.0
      %644 = vmatpush1.msra.mxu0 0.0
      %645 = vmatprep.subr.mxu0 0.0
      %646 = vmatpush1.msra.mxu0 0.0
      %647 = vmatprep.subr.mxu0 0.0
      %648 = vmatpush1.msra.mxu0 0.0
      %649 = vmatprep.subr.mxu0 0.0
      %650 = vmatpush1.msra.mxu0 0.0
      %651 = vmatprep.subr.mxu0 0.0
      %652 = vmatpush1.msra.mxu0 0.0
      %653 = vmatprep.subr.mxu0 0.0
      %654 = vmatpush1.msra.mxu0 0.0
      %655 = vmatprep.subr.mxu0 0.0
      %656 = vmatpush1.msra.mxu0 0.0
      %657 = vmatprep.subr.mxu0 0.0
      %658 = vmatpush1.msra.mxu0 0.0
      %659 = vmatprep.subr.mxu0 0.0
      %660 = vmatpush1.msra.mxu0 0.0
      %661 = vmatprep.subr.mxu0 0.0
      %662 = vmatpush1.msra.mxu0 0.0
      %663 = vmatprep.subr.mxu0 0.0
      %664 = vmatpush1.msra.mxu0 0.0
      %665 = vmatprep.subr.mxu0 0.0
      %666 = vmatpush1.msra.mxu0 0.0
      %667 = vmatprep.subr.mxu0 0.0
      %668 = vmatpush1.msra.mxu0 0.0
      %669 = vmatprep.subr.mxu0 0.0
      %670 = vmatpush1.msra.mxu0 0.0
      %671 = vmatprep.mubr.f32.mxu0 0.0
      %672 = vmatmul.mubr.f32.gmra.mrb[0].mxu0 %v605
      %v673 = vpop.f32.mrb[0].mxu0
      %v674 = vadd.f32 0.0, %v673
      %v675 = vpop.f32.mrb[0].mxu0
      %v676 = vadd.f32 0.0, %v675
      %677 = vdwg.mxu0
      %678 = vmatprep.subr.mxu0 %v598
      %679 = vmatpush1.msra.mxu0 %v597
      %680 = vmatprep.subr.mxu0 %v602
      %681 = vmatpush1.msra.mxu0 %v601
      %682 = vmatprep.subr.mxu0 0.0
      %683 = vmatpush1.msra.mxu0 0.0
      %684 = vmatprep.subr.mxu0 0.0
      %685 = vmatpush1.msra.mxu0 0.0
      %686 = vmatprep.subr.mxu0 0.0
      %687 = vmatpush1.msra.mxu0 0.0
      %688 = vmatprep.subr.mxu0 0.0
      %689 = vmatpush1.msra.mxu0 0.0
      %690 = vmatprep.subr.mxu0 0.0
      %691 = vmatpush1.msra.mxu0 0.0
      %692 = vmatprep.subr.mxu0 0.0
      %693 = vmatpush1.msra.mxu0 0.0
      %694 = vmatprep.subr.mxu0 0.0
      %695 = vmatpush1.msra.mxu0 0.0
      %696 = vmatprep.subr.mxu0 0.0
      %697 = vmatpush1.msra.mxu0 0.0
      %698 = vmatprep.subr.mxu0 0.0
      %699 = vmatpush1.msra.mxu0 0.0
      %700 = vmatprep.subr.mxu0 0.0
      %701 = vmatpush1.msra.mxu0 0.0
      %702 = vmatprep.subr.mxu0 0.0
      %703 = vmatpush1.msra.mxu0 0.0
      %704 = vmatprep.subr.mxu0 0.0
      %705 = vmatpush1.msra.mxu0 0.0
      %706 = vmatprep.subr.mxu0 0.0
      %707 = vmatpush1.msra.mxu0 0.0
      %708 = vmatprep.subr.mxu0 0.0
      %709 = vmatpush1.msra.mxu0 0.0
      %710 = vmatprep.subr.mxu0 0.0
      %711 = vmatpush1.msra.mxu0 0.0
      %712 = vmatprep.subr.mxu0 0.0
      %713 = vmatpush1.msra.mxu0 0.0
      %714 = vmatprep.subr.mxu0 0.0
      %715 = vmatpush1.msra.mxu0 0.0
      %716 = vmatprep.subr.mxu0 0.0
      %717 = vmatpush1.msra.mxu0 0.0
      %718 = vmatprep.subr.mxu0 0.0
      %719 = vmatpush1.msra.mxu0 0.0
      %720 = vmatprep.subr.mxu0 0.0
      %721 = vmatpush1.msra.mxu0 0.0
      %722 = vmatprep.subr.mxu0 0.0
      %723 = vmatpush1.msra.mxu0 0.0
      %724 = vmatprep.subr.mxu0 0.0
      %725 = vmatpush1.msra.mxu0 0.0
      %726 = vmatprep.subr.mxu0 0.0
      %727 = vmatpush1.msra.mxu0 0.0
      %728 = vmatprep.subr.mxu0 0.0
      %729 = vmatpush1.msra.mxu0 0.0
      %730 = vmatprep.subr.mxu0 0.0
      %731 = vmatpush1.msra.mxu0 0.0
      %732 = vmatprep.subr.mxu0 0.0
      %733 = vmatpush1.msra.mxu0 0.0
      %734 = vmatprep.subr.mxu0 0.0
      %735 = vmatpush1.msra.mxu0 0.0
      %736 = vmatprep.subr.mxu0 0.0
      %737 = vmatpush1.msra.mxu0 0.0
      %738 = vmatprep.subr.mxu0 0.0
      %739 = vmatpush1.msra.mxu0 0.0
      %740 = vmatprep.subr.mxu0 0.0
      %741 = vmatpush1.msra.mxu0 0.0
      %742 = vmatprep.mubr.f32.mxu0 0.0
      %743 = vmatmul.mubr.f32.gmra.mrb[0].mxu0 %v605
      %v744 = vpop.f32.mrb[0].mxu0
      %v745 = vadd.f32 0.0, %v744
      %v746 = vpop.f32.mrb[0].mxu0
      %v747 = vadd.f32 0.0, %v746
      %748 = vdwg.mxu0
      %v753 = vcombine.low %v674, %v676
      %v754 = vcombine.low %v745, %v747
      %757 = vst [vmem:[%s273] sm:$0xff] %v753
      %758 = vst [vmem:[%s273 + $0x8] sm:$0xff] %v754
      %v761 = vsub.f32 %v674, %v281
      %v762 = vsub.f32 %v676, %v290
      %v763 = vsub.f32 %v745, %v282
      %v764 = vsub.f32 %v747, %v291
      %v765 = vmul.f32 %v761, %v761
      %v766 = vmul.f32 %v762, %v762
      %v767 = vmul.f32 %v763, %v763
      %v768 = vmul.f32 %v764, %v764
      %v769 = vsel %vm299, %v765, 0.0
      %v770 = vsel %vm299, %v766, 0.0
      %v771 = vadd.f32 %v769, %v770
      %v772 = vsel %vm299, %v767, 0.0
      %v773 = vadd.f32 %v771, %v772
      %v774 = vsel %vm299, %v768, 0.0
      %v775 = vadd.f32 %v773, %v774
      %776 = vadd.xlane.f32.xlu0 %v775
      %v777 = vpop.xlane.xlu0 %776
      %v778 = vrot.slane %v777, 4
      %v779 = vadd.f32 %v777, %v778
      %v780 = vrot.slane %v779, 2
      %v781 = vadd.f32 %v779, %v780
      %v782 = vrot.slane %v781, 1
      %v783 = vadd.f32 %v781, %v782
      %s784 = vtos %v783
      %v785 = vstv %s784
      %vm786 = vcmask 0
      %787 = vst.msk [vmem:[%s280] sm:$0x1] %vm786, %v785
      %s788 = smul.u32 4, %s22
      %p789 = scmp.lt.s32.totalorder %s21, 1
      %s790 = scalar_select %p789, %s21, 1
      %p791 = scmp.lt.s32.totalorder %s788, 3
      %s792 = scalar_select %p791, %s788, 3
      %s793 = smul.addr %s790, 4
      %s794 = sadd.s32 %s792, %s793
      %s795 = smul.addr %s794, 4
      %s796 = scalar_lea.vmem %s4, %s795
      %p797 = scmp.lt.s32.totalorder %s21, 1
      %s798 = scalar_select %p797, %s21, 1
      %p799 = scmp.lt.s32.totalorder %s22, 0
      %s800 = scalar_select %p799, %s22, 0
      %s801 = sadd.s32 %s800, %s798
      %s802 = scalar_lea.vmem %s5, %s801
      // Predicated region
      $region37: #{vector_quantizer.1} parent=35 // pred_check
        %p803 = pneg %p140
      $region38: #{vector_quantizer.1} parent=35 // pred_check_branch
        %805 = sbr.rel (%p803) target = $region40
      $region39: #{vector_quantizer.1} parent=35 // pred_region
        %s806 = smul.u32 4, %s22
      $region40: #{vector_quantizer.1} parent=35 // pred_fallthru
        _
      // Predicated region
      $region41: #{vector_quantizer.1} parent=35 // pred_check
        %p807 = pneg %p168
      $region42: #{vector_quantizer.1} parent=35 // pred_check_branch
        %809 = sbr.rel (%p807) target = $region44
      $region43: #{vector_quantizer.1} parent=35 // pred_region
        _
      $region44: #{vector_quantizer.1} parent=35 // pred_fallthru
        _
    $region36: #{vector_quantizer.1} parent=5 // pred_fallthru
      _
    %p810 = scmp.le.s32.totalorder 2, %s12
    // Predicated region
    $region45: #{vector_quantizer.1} parent=5 // pred_check
      %p811 = pneg %p810
    $region46: #{vector_quantizer.1} parent=5 // pred_check_branch
      %813 = sbr.rel (%p811) target = $region48
    $region47: #{vector_quantizer.1} parent=5 // pred_region
      %s814 = ssub.s32 %s12, 2
      // Predicated region
      $region49: #{vector_quantizer.1} parent=47 // pred_check
        %p815 = pneg %p146
      $region50: #{vector_quantizer.1} parent=47 // pred_check_branch
        %817 = sbr.rel (%p815) target = $region52
      $region51: #{vector_quantizer.1} parent=47 // pred_region
        %s818 = smul.u32 4, %s24
        %p819 = scmp.lt.s32.totalorder %s23, 1
        %s820 = scalar_select %p819, %s23, 1
        %p821 = scmp.lt.s32.totalorder %s818, 3
        %s822 = scalar_select %p821, %s818, 3
        %s823 = smul.addr %s820, 4
        %s824 = sadd.s32 %s822, %s823
        %s825 = smul.addr %s824, 4
        %s826 = scalar_lea.vmem %s4, %s825
      $region52: #{vector_quantizer.1} parent=47 // pred_fallthru
        _
      // Predicated region
      $region53: #{vector_quantizer.1} parent=47 // pred_check
        %p827 = pneg %p174
      $region54: #{vector_quantizer.1} parent=47 // pred_check_branch
        %829 = sbr.rel (%p827) target = $region56
      $region55: #{vector_quantizer.1} parent=47 // pred_region
        %p830 = scmp.lt.s32.totalorder %s23, 1
        %s831 = scalar_select %p830, %s23, 1
        %p832 = scmp.lt.s32.totalorder %s24, 0
        %s833 = scalar_select %p832, %s24, 0
        %s834 = sadd.s32 %s833, %s831
        %s835 = scalar_lea.vmem %s5, %s834
      $region56: #{vector_quantizer.1} parent=47 // pred_fallthru
        _
    $region48: #{vector_quantizer.1} parent=5 // pred_fallthru
      _
  $region6: #{vector_quantizer.1} parent=0 // loop_footer
    %s16 = sadd.s32 1, %s12
  $region7: #{vector_quantizer.1} parent=0 // loop_footer_branch
    %11 = sbr.rel target = $region3
  $region8: #{vector_quantizer.1} parent=0 // loop_exit
    _

</llo_original>
